<compile_context>
chip_gen: v7x
topology: tpu7x:2x2x1
jax: 0.10.0
libtpu: 0.0.40
codegen_flags: <defaults>
</compile_context>

<pallas_src>
import functools

import jax
import jax.numpy as jnp
from jax.experimental import pallas as pl
from jax.experimental.pallas import tpu as pltpu  # noqa: F401  (kept for TPU-specific extensions)


def _ceil_to(x, m):
    return ((x + m - 1) // m) * m


def _slab_row_offsets(V, D):
    """Row offsets of the four weight blocks inside the packed weight slab."""
    o_fused = 0
    o_ew2 = o_fused + _ceil_to(V, 8)
    o_cw1 = o_ew2 + _ceil_to(D, 8)
    o_cw2 = o_cw1 + _ceil_to(2 * D, 8)
    total = o_cw2 + _ceil_to(D, 8)
    return (o_fused, o_ew2, o_cw1, o_cw2), total


def semnn_kernel(ids_ref, w_ref, b_ref, out_ref, *, bp, seq, V, D, offs):
    rows = 2 * bp
    o_fused, o_ew2, o_cw1, o_cw2 = offs

    # ---- Bag-of-words counts built in-kernel (VPU compares, no HBM one-hot).
    # Masked-out tokens and padded rows carry id == -1, which never matches.
    ids = ids_ref[...]                                            # (2*bp, S) int32
    vocab = jax.lax.broadcasted_iota(jnp.int32, (rows, V), 1)     # (2*bp, V)
    counts_i = jnp.zeros((rows, V), jnp.int32)
    for s in range(seq):                                          # S is tiny & static
        counts_i = counts_i + (vocab == ids[:, s:s + 1]).astype(jnp.int32)
    counts = counts_i.astype(jnp.float32)

    # ---- Packed weights / biases: static slices of the two slabs.
    w_fused = w_ref[pl.ds(o_fused, V), pl.ds(0, D)]               # emb @ enc_w1 (V, D)
    ew2 = w_ref[pl.ds(o_ew2, D), pl.ds(0, D)]                     # (D, D)
    cw1 = w_ref[pl.ds(o_cw1, 2 * D), pl.ds(0, D)]                 # (2D, D)
    cw2 = w_ref[pl.ds(o_cw2, D), :]                               # (D, WL) lane-dense
    b = b_ref[...]                                                # (4, WL)
    eb1 = b[0:1, :D]
    eb2 = b[1:2, :D]
    cb1 = b[2:3, :D]
    cb2 = b[3:4, :]

    # ---- Shared encoder, run once on the stacked (text_a ++ text_b) batch.
    # counts @ (emb @ enc_w1) fuses embedding gather + masked sum + dense1.
    h = jnp.tanh(jnp.dot(counts, w_fused, preferred_element_type=jnp.float32) + eb1)
    h = jnp.tanh(jnp.dot(h, ew2, preferred_element_type=jnp.float32) + eb2)   # (2bp, D)

    # ---- Classifier: lane-concat (cheap XLU shift) -> single dense1 matmul.
    hcat = jnp.concatenate([h[:bp, :], h[bp:, :]], axis=-1)       # (bp, 2D)
    hc = jnp.tanh(jnp.dot(hcat, cw1, preferred_element_type=jnp.float32) + cb1)

    # Lane-dense (bp, WL) store; real logits live in the first L columns.
    out_ref[...] = jnp.dot(hc, cw2, preferred_element_type=jnp.float32) + cb2


def prepare_params(params):
    """One-time packing: fuse emb@enc_w1 and build the two VMEM slabs."""
    emb = params["embedding"]
    V, D = emb.shape
    L = params["cls_b2"].shape[-1]
    WL = max(128, _ceil_to(L, 128))                               # lane-dense output width

    # No nonlinearity between the masked sum and encoder dense1, so
    # (counts @ emb) @ enc_w1 == counts @ (emb @ enc_w1) (exact up to FP assoc).
    w_fused = jnp.dot(emb, params["enc_w1"])                      # (V, D)

    def pad_block(w, rows, lanes):
        return jnp.pad(w, ((0, rows - w.shape[0]), (0, lanes - w.shape[1])))

    offs, total_rows = _slab_row_offsets(V, D)
    o_fused, o_ew2, o_cw1, o_cw2 = offs
    w_slab = jnp.concatenate([
        pad_block(w_fused, o_ew2 - o_fused, WL),
        pad_block(params["enc_w2"], o_cw1 - o_ew2, WL),
        pad_block(params["cls_w1"], o_cw2 - o_cw1, WL),
        pad_block(params["cls_w2"], total_rows - o_cw2, WL),
    ], axis=0)                                                    # (total_rows, WL)

    b_slab = jnp.concatenate([
        pad_block(params["enc_b1"], 1, WL),
        pad_block(params["enc_b2"], 1, WL),
        pad_block(params["cls_b1"], 1, WL),
        pad_block(params["cls_b2"], 1, WL),
    ], axis=0)                                                    # (4, WL)

    return {"w_slab": w_slab, "b_slab": b_slab,
            "V": V, "D": D, "L": L, "WL": WL, "offs": offs}


def make_semnn_forward(prepped):
    """Returns a jitted forward: masked-id prep + one Pallas call."""
    w_slab, b_slab = prepped["w_slab"], prepped["b_slab"]
    V, D, L, WL, offs = (prepped["V"], prepped["D"], prepped["L"],
                         prepped["WL"], prepped["offs"])

    @jax.jit
    def forward(a_ids, b_ids, a_mask, b_mask):
        B, S = a_ids.shape
        BP = max(8, _ceil_to(B, 8))                               # sublane-padded batch

        def prep_ids(ids, mask):
            masked = jnp.where(mask, ids.astype(jnp.int32), jnp.int32(-1))
            return jnp.pad(masked, ((0, BP - B), (0, 0)), constant_values=-1)

        ids = jnp.concatenate([prep_ids(a_ids, a_mask),
                               prep_ids(b_ids, b_mask)], axis=0)  # (2*BP, S) int32

        out = pl.pallas_call(
            functools.partial(semnn_kernel, bp=BP, seq=S, V=V, D=D, offs=offs),
            out_shape=jax.ShapeDtypeStruct((BP, WL), jnp.float32),
            # No grid / no BlockSpecs: single invocation, whole (tiny) arrays
            # resident in VMEM, no pipeline double-buffering overhead.
        )(ids, w_slab, b_slab)

        return out[:B, :L]

    return forward


def make_params(key, vocab_size, in_feat, num_labels):
    """Deterministic synthetic parameters (nn.Linear analog, W stored (in, out))."""
    ks = jax.random.split(key, 10)
    D = in_feat
    emb = 0.1 * jax.random.normal(ks[0], (vocab_size, D), jnp.float32)
    emb = emb.at[0].set(0.0)  # padding_idx=0 row is zero

    def linear(k, fin, fout):
        kw, kb = jax.random.split(k)
        bound = 1.0 / jnp.sqrt(fin)
        w = jax.random.uniform(kw, (fin, fout), jnp.float32, -bound, bound)
        b = jax.random.uniform(kb, (1, fout), jnp.float32, -bound, bound)
        return w, b

    enc_w1, enc_b1 = linear(ks[1], D, D)
    enc_w2, enc_b2 = linear(ks[2], D, D)
    cls_w1, cls_b1 = linear(ks[3], 2 * D, D)       # Classifier.dense1: 2*D -> D
    cls_w2, cls_b2 = linear(ks[4], D, num_labels)  # Classifier.dense2: D -> L

    return {
        "embedding": emb,
        "enc_w1": enc_w1, "enc_b1": enc_b1,
        "enc_w2": enc_w2, "enc_b2": enc_b2,
        "cls_w1": cls_w1, "cls_b1": cls_b1,
        "cls_w2": cls_w2, "cls_b2": cls_b2,
    }


def semnn_reference(a_ids, b_ids, a_mask, b_mask, params):
    """Plain-JAX reference mirroring the PyTorch forward (eval mode)."""
    emb = params["embedding"]

    def encode(ids, mask):
        vecs = jnp.take(emb, ids, axis=0)
        x = jnp.sum(vecs * mask.astype(jnp.float32)[:, :, None], axis=1)
        x = jnp.tanh(x @ params["enc_w1"] + params["enc_b1"])
        x = jnp.tanh(x @ params["enc_w2"] + params["enc_b2"])
        return x

    xa = encode(a_ids, a_mask)
    xb = encode(b_ids, b_mask)
    pooled = jnp.concatenate([xa, xb], axis=-1)
    h = jnp.tanh(pooled @ params["cls_w1"] + params["cls_b1"])
    return h @ params["cls_w2"] + params["cls_b2"]


if __name__ == "__main__":
    B, S, D, V, L = 2, 8, 32, 64, 3

    key = jax.random.PRNGKey(0)
    k_par, k_a, k_b, k_ma, k_mb = jax.random.split(key, 5)

    params = make_params(k_par, vocab_size=V, in_feat=D, num_labels=L)
    prepped = prepare_params(params)
    forward = make_semnn_forward(prepped)

    text_a_ids = jax.random.randint(k_a, (B, S), 0, V, dtype=jnp.int32)
    text_b_ids = jax.random.randint(k_b, (B, S), 0, V, dtype=jnp.int32)
    # boolean attention masks; guarantee first token is attended
    text_a_mask = jax.random.bernoulli(k_ma, 0.7, (B, S)).at[:, 0].set(True)
    text_b_mask = jax.random.bernoulli(k_mb, 0.7, (B, S)).at[:, 0].set(True)

    logits = forward(text_a_ids, text_b_ids, text_a_mask, text_b_mask)
    logits = jax.block_until_ready(logits)

    ref = semnn_reference(text_a_ids, text_b_ids, text_a_mask, text_b_mask, params)
    assert logits.shape == (B, L)
    assert jnp.allclose(logits, ref, atol=1e-4, rtol=1e-4), (logits, ref)

    print("KERNEL_OK")
</pallas_src>

<mosaic_0001>
module attributes {stable_mosaic.version = 11 : i64} {
  func.func @semnn_kernel(%arg0: memref<16x8xi32, #tpu.memory_space<vmem>>, %arg1: memref<192x128xf32, #tpu.memory_space<vmem>>, %arg2: memref<4x128xf32, #tpu.memory_space<vmem>>, %arg3: memref<8x128xf32, #tpu.memory_space<vmem>>) attributes {dimension_semantics = [], scalar_prefetch = 0 : i64, scratch_operands = 0 : i64, tpu.core_type = #tpu.core_type<tc>} {
    %c0 = arith.constant 0 : index
    %c0_0 = arith.constant 0 : index
    %0 = vector.load %arg0[%c0, %c0_0] : memref<16x8xi32, #tpu.memory_space<vmem>>, vector<16x8xi32>
    %1 = tpu.iota {dimensions = array<i32: 1>} : vector<16x64xi32>
    %c0_i32 = arith.constant 0 : i32
    %2 = vector.broadcast %c0_i32 : i32 to vector<16x64xi32>
    %3 = vector.extract_strided_slice %0 {offsets = [0, 0], sizes = [16, 1], strides = [1, 1]} : vector<16x8xi32> to vector<16x1xi32>
    %4 = vector.broadcast %3 : vector<16x1xi32> to vector<16x64xi32>
    %5 = arith.cmpi eq, %1, %4 : vector<16x64xi32>
    %6 = arith.extui %5 : vector<16x64xi1> to vector<16x64xi32>
    %7 = arith.addi %2, %6 : vector<16x64xi32>
    %8 = vector.extract_strided_slice %0 {offsets = [0, 1], sizes = [16, 1], strides = [1, 1]} : vector<16x8xi32> to vector<16x1xi32>
    %9 = vector.broadcast %8 : vector<16x1xi32> to vector<16x64xi32>
    %10 = arith.cmpi eq, %1, %9 : vector<16x64xi32>
    %11 = arith.extui %10 : vector<16x64xi1> to vector<16x64xi32>
    %12 = arith.addi %7, %11 : vector<16x64xi32>
    %13 = vector.extract_strided_slice %0 {offsets = [0, 2], sizes = [16, 1], strides = [1, 1]} : vector<16x8xi32> to vector<16x1xi32>
    %14 = vector.broadcast %13 : vector<16x1xi32> to vector<16x64xi32>
    %15 = arith.cmpi eq, %1, %14 : vector<16x64xi32>
    %16 = arith.extui %15 : vector<16x64xi1> to vector<16x64xi32>
    %17 = arith.addi %12, %16 : vector<16x64xi32>
    %18 = vector.extract_strided_slice %0 {offsets = [0, 3], sizes = [16, 1], strides = [1, 1]} : vector<16x8xi32> to vector<16x1xi32>
    %19 = vector.broadcast %18 : vector<16x1xi32> to vector<16x64xi32>
    %20 = arith.cmpi eq, %1, %19 : vector<16x64xi32>
    %21 = arith.extui %20 : vector<16x64xi1> to vector<16x64xi32>
    %22 = arith.addi %17, %21 : vector<16x64xi32>
    %23 = vector.extract_strided_slice %0 {offsets = [0, 4], sizes = [16, 1], strides = [1, 1]} : vector<16x8xi32> to vector<16x1xi32>
    %24 = vector.broadcast %23 : vector<16x1xi32> to vector<16x64xi32>
    %25 = arith.cmpi eq, %1, %24 : vector<16x64xi32>
    %26 = arith.extui %25 : vector<16x64xi1> to vector<16x64xi32>
    %27 = arith.addi %22, %26 : vector<16x64xi32>
    %28 = vector.extract_strided_slice %0 {offsets = [0, 5], sizes = [16, 1], strides = [1, 1]} : vector<16x8xi32> to vector<16x1xi32>
    %29 = vector.broadcast %28 : vector<16x1xi32> to vector<16x64xi32>
    %30 = arith.cmpi eq, %1, %29 : vector<16x64xi32>
    %31 = arith.extui %30 : vector<16x64xi1> to vector<16x64xi32>
    %32 = arith.addi %27, %31 : vector<16x64xi32>
    %33 = vector.extract_strided_slice %0 {offsets = [0, 6], sizes = [16, 1], strides = [1, 1]} : vector<16x8xi32> to vector<16x1xi32>
    %34 = vector.broadcast %33 : vector<16x1xi32> to vector<16x64xi32>
    %35 = arith.cmpi eq, %1, %34 : vector<16x64xi32>
    %36 = arith.extui %35 : vector<16x64xi1> to vector<16x64xi32>
    %37 = arith.addi %32, %36 : vector<16x64xi32>
    %38 = vector.extract_strided_slice %0 {offsets = [0, 7], sizes = [16, 1], strides = [1, 1]} : vector<16x8xi32> to vector<16x1xi32>
    %39 = vector.broadcast %38 : vector<16x1xi32> to vector<16x64xi32>
    %40 = arith.cmpi eq, %1, %39 : vector<16x64xi32>
    %41 = arith.extui %40 : vector<16x64xi1> to vector<16x64xi32>
    %42 = arith.addi %37, %41 : vector<16x64xi32>
    %43 = arith.sitofp %42 : vector<16x64xi32> to vector<16x64xf32>
    %c0_1 = arith.constant 0 : index
    %c0_2 = arith.constant 0 : index
    %44 = vector.load %arg1[%c0_1, %c0_2] : memref<192x128xf32, #tpu.memory_space<vmem>>, vector<64x32xf32>
    %c64 = arith.constant 64 : index
    %c0_3 = arith.constant 0 : index
    %45 = vector.load %arg1[%c64, %c0_3] : memref<192x128xf32, #tpu.memory_space<vmem>>, vector<32x32xf32>
    %c96 = arith.constant 96 : index
    %c0_4 = arith.constant 0 : index
    %46 = vector.load %arg1[%c96, %c0_4] : memref<192x128xf32, #tpu.memory_space<vmem>>, vector<64x32xf32>
    %c160 = arith.constant 160 : index
    %c0_5 = arith.constant 0 : index
    %47 = vector.load %arg1[%c160, %c0_5] : memref<192x128xf32, #tpu.memory_space<vmem>>, vector<32x128xf32>
    %c0_6 = arith.constant 0 : index
    %c0_7 = arith.constant 0 : index
    %48 = vector.load %arg2[%c0_6, %c0_7] : memref<4x128xf32, #tpu.memory_space<vmem>>, vector<4x128xf32>
    %49 = vector.extract_strided_slice %48 {offsets = [0, 0], sizes = [1, 32], strides = [1, 1]} : vector<4x128xf32> to vector<1x32xf32>
    %50 = vector.extract_strided_slice %48 {offsets = [1, 0], sizes = [1, 32], strides = [1, 1]} : vector<4x128xf32> to vector<1x32xf32>
    %51 = vector.extract_strided_slice %48 {offsets = [2, 0], sizes = [1, 32], strides = [1, 1]} : vector<4x128xf32> to vector<1x32xf32>
    %52 = vector.extract_strided_slice %48 {offsets = [3, 0], sizes = [1, 128], strides = [1, 1]} : vector<4x128xf32> to vector<1x128xf32>
    %cst = arith.constant dense<0.000000e+00> : vector<16x32xf32>
    %53 = tpu.matmul %43, %44, %cst {dimension_numbers = #tpu.dot_dimension_numbers<[1], [0], [0], [1], [0, 0, 1, 1], [], []>} : vector<16x64xf32>, vector<64x32xf32>, vector<16x32xf32> -> vector<16x32xf32>
    %54 = vector.broadcast %49 : vector<1x32xf32> to vector<16x32xf32>
    %55 = arith.addf %53, %54 : vector<16x32xf32>
    %56 = math.tanh %55 : vector<16x32xf32>
    %cst_8 = arith.constant dense<0.000000e+00> : vector<16x32xf32>
    %57 = tpu.matmul %56, %45, %cst_8 {dimension_numbers = #tpu.dot_dimension_numbers<[1], [0], [0], [1], [0, 0, 1, 1], [], []>} : vector<16x32xf32>, vector<32x32xf32>, vector<16x32xf32> -> vector<16x32xf32>
    %58 = vector.broadcast %50 : vector<1x32xf32> to vector<16x32xf32>
    %59 = arith.addf %57, %58 : vector<16x32xf32>
    %60 = math.tanh %59 : vector<16x32xf32>
    %61 = vector.extract_strided_slice %60 {offsets = [0, 0], sizes = [8, 32], strides = [1, 1]} : vector<16x32xf32> to vector<8x32xf32>
    %62 = vector.extract_strided_slice %60 {offsets = [8, 0], sizes = [8, 32], strides = [1, 1]} : vector<16x32xf32> to vector<8x32xf32>
    %63 = tpu.concatenate %61, %62 in 1 : vector<8x32xf32>, vector<8x32xf32> -> vector<8x64xf32>
    %cst_9 = arith.constant dense<0.000000e+00> : vector<8x32xf32>
    %64 = tpu.matmul %63, %46, %cst_9 {dimension_numbers = #tpu.dot_dimension_numbers<[1], [0], [0], [1], [0, 0, 1, 1], [], []>} : vector<8x64xf32>, vector<64x32xf32>, vector<8x32xf32> -> vector<8x32xf32>
    %65 = vector.broadcast %51 : vector<1x32xf32> to vector<8x32xf32>
    %66 = arith.addf %64, %65 : vector<8x32xf32>
    %67 = math.tanh %66 : vector<8x32xf32>
    %cst_10 = arith.constant dense<0.000000e+00> : vector<8x128xf32>
    %68 = tpu.matmul %67, %47, %cst_10 {dimension_numbers = #tpu.dot_dimension_numbers<[1], [0], [0], [1], [0, 0, 1, 1], [], []>} : vector<8x32xf32>, vector<32x128xf32>, vector<8x128xf32> -> vector<8x128xf32>
    %69 = vector.broadcast %52 : vector<1x128xf32> to vector<8x128xf32>
    %70 = arith.addf %68, %69 : vector<8x128xf32>
    %c0_11 = arith.constant 0 : index
    %c0_12 = arith.constant 0 : index
    %71 = vector.load %arg3[%c0_11, %c0_12] : memref<8x128xf32, #tpu.memory_space<vmem>>, vector<8x128xf32>
    tpu.vector_store %arg3[%c0_11, %c0_12], %70 {strides = array<i32>} : memref<8x128xf32, #tpu.memory_space<vmem>>, vector<8x128xf32>,
    return
  }
}

</mosaic_0001>

<llo_original>
// kernel: forward.1
$region0: #{forward.1}
  #allocation0 [shape = 'u32[]', space=smem, size = 0x4, offset = 0x4, fixed_abs, tag = 'smem constant byte address 0x4 - core index']
  #allocation1 [shape = 'u32[144,128]{1,0:T(1,128)}', space=vmem, size = 0x12000, scoped, tag = 'internal scratch']
  %s0 = inlined_call_operand.vmem [shape: s32[16,8], index: 0, kind: input, shape index: {}]
  %s1 = inlined_call_operand.hbm [shape: f32[192,128], index: 1, kind: input, shape index: {}]
  %s2 = inlined_call_operand.vmem [shape: f32[4,128], index: 2, kind: input, shape index: {}]
  %s3 = inlined_call_operand.vmem [shape: f32[8,128], index: 3, kind: output, shape index: {}]
  %s4 = sld [smem:[#allocation0]]
  $region26: #{forward.1} parent=0
    _
  %s6 = ssub.s32 1, %s4
  %s7 = scalar_select 0, %s6, %s4
  $region1: #{forward.1} parent=0
    #allocation2 [shape = 'u8[98304]{0}', space=vmem, size = 0x18000, scoped, tag = 'input window, operand 1, single buffered']
    #allocation3 [shape = 's32[1]{0}', space=sflag, size = 0x4, scoped, tag = 'scoped memory for forward.1']
    %8 = vsyncpa [#allocation3], 0
    // Predicated region
    $region2: #{forward.1} parent=1 // pred_check
      _
    $region3: #{forward.1} parent=1 // pred_check_branch
      %10 = sbr.rel (0) target = $region5
    $region4: #{forward.1} parent=1 // pred_region
      _
    $region5: #{forward.1} parent=1 // pred_fallthru
      _
    // Predicated region
    $region6: #{forward.1} parent=1 // pred_check
      _
    $region7: #{forward.1} parent=1 // pred_check_branch
      %12 = sbr.rel (0) target = $region9
    $region8: #{forward.1} parent=1 // pred_region
      %s14 = ssub.s32 3072, 3072
      %15 = vsyncadd [#allocation3], %s14
      %s16 = sshll.u32 [#allocation2], 4
      %s17 = int_to_ptr.vmem [resolvable:$true] %s16
      %22 = dma.hbm_to_vmem [thread:$0]  %s1, 3072, %s17, [#allocation3], 128, 128, 8
    $region9: #{forward.1} parent=1 // pred_fallthru
      _
    // Predicated region
    $region10: #{forward.1} parent=1 // pred_check
      _
    $region11: #{forward.1} parent=1 // pred_check_branch
      %24 = sbr.rel (0) target = $region13
    $region12: #{forward.1} parent=1 // pred_region
      _
    $region13: #{forward.1} parent=1 // pred_fallthru
      _
    // Predicated region
    $region14: #{forward.1} parent=1 // pred_check
      _
    $region15: #{forward.1} parent=1 // pred_check_branch
      %26 = sbr.rel (0) target = $region17
    $region16: #{forward.1} parent=1 // pred_region
      %27 = dma.done [#allocation3], 3072
    $region17: #{forward.1} parent=1 // pred_fallthru
      _
    %v28 = vld [vmem:[%s0] sm:$0xff]
    %v29 = vld [vmem:[%s0 + $0x8] sm:$0xff]
    %v30 = vlaneseq
    %v31 = vand.u32 %v30, 127
    %32 = vset.pattern.permute.xlu0 0
    %33 = vperm.xlu0 %32, %v28
    %v34 = vpop.permute.xlu0 %33
    %35 = vset.pattern.permute.xlu0 0
    %36 = vperm.xlu0 %35, %v29
    %v37 = vpop.permute.xlu0 %36
    %vm38 = vcmp.eq.s32.totalorder %v31, %v34
    %vm39 = vcmp.eq.s32.totalorder %v31, %v37
    %v40 = vsel %vm38, 1, 0
    %v41 = vsel %vm39, 1, 0
    %42 = vset.pattern.permute.xlu0 1
    %43 = vperm.xlu0 %42, %v28
    %v44 = vpop.permute.xlu0 %43
    %45 = vset.pattern.permute.xlu0 1
    %46 = vperm.xlu0 %45, %v29
    %v47 = vpop.permute.xlu0 %46
    %vm48 = vcmp.eq.s32.totalorder %v31, %v44
    %vm49 = vcmp.eq.s32.totalorder %v31, %v47
    %v50 = vsel %vm48, 1, 0
    %v51 = vsel %vm49, 1, 0
    %v52 = vadd.s32 %v40, %v50
    %v53 = vadd.s32 %v41, %v51
    %54 = vset.pattern.permute.xlu0 2
    %55 = vperm.xlu0 %54, %v28
    %v56 = vpop.permute.xlu0 %55
    %57 = vset.pattern.permute.xlu0 2
    %58 = vperm.xlu0 %57, %v29
    %v59 = vpop.permute.xlu0 %58
    %vm60 = vcmp.eq.s32.totalorder %v31, %v56
    %vm61 = vcmp.eq.s32.totalorder %v31, %v59
    %v62 = vsel %vm60, 1, 0
    %v63 = vsel %vm61, 1, 0
    %v64 = vadd.s32 %v52, %v62
    %v65 = vadd.s32 %v53, %v63
    %66 = vset.pattern.permute.xlu0 3
    %67 = vperm.xlu0 %66, %v28
    %v68 = vpop.permute.xlu0 %67
    %69 = vset.pattern.permute.xlu0 3
    %70 = vperm.xlu0 %69, %v29
    %v71 = vpop.permute.xlu0 %70
    %vm72 = vcmp.eq.s32.totalorder %v31, %v68
    %vm73 = vcmp.eq.s32.totalorder %v31, %v71
    %v74 = vsel %vm72, 1, 0
    %v75 = vsel %vm73, 1, 0
    %v76 = vadd.s32 %v64, %v74
    %v77 = vadd.s32 %v65, %v75
    %78 = vset.pattern.permute.xlu0 4
    %79 = vperm.xlu0 %78, %v28
    %v80 = vpop.permute.xlu0 %79
    %81 = vset.pattern.permute.xlu0 4
    %82 = vperm.xlu0 %81, %v29
    %v83 = vpop.permute.xlu0 %82
    %vm84 = vcmp.eq.s32.totalorder %v31, %v80
    %vm85 = vcmp.eq.s32.totalorder %v31, %v83
    %v86 = vsel %vm84, 1, 0
    %v87 = vsel %vm85, 1, 0
    %v88 = vadd.s32 %v76, %v86
    %v89 = vadd.s32 %v77, %v87
    %90 = vset.pattern.permute.xlu0 5
    %91 = vperm.xlu0 %90, %v28
    %v92 = vpop.permute.xlu0 %91
    %93 = vset.pattern.permute.xlu0 5
    %94 = vperm.xlu0 %93, %v29
    %v95 = vpop.permute.xlu0 %94
    %vm96 = vcmp.eq.s32.totalorder %v31, %v92
    %vm97 = vcmp.eq.s32.totalorder %v31, %v95
    %v98 = vsel %vm96, 1, 0
    %v99 = vsel %vm97, 1, 0
    %v100 = vadd.s32 %v88, %v98
    %v101 = vadd.s32 %v89, %v99
    %102 = vset.pattern.permute.xlu0 6
    %103 = vperm.xlu0 %102, %v28
    %v104 = vpop.permute.xlu0 %103
    %105 = vset.pattern.permute.xlu0 6
    %106 = vperm.xlu0 %105, %v29
    %v107 = vpop.permute.xlu0 %106
    %vm108 = vcmp.eq.s32.totalorder %v31, %v104
    %vm109 = vcmp.eq.s32.totalorder %v31, %v107
    %v110 = vsel %vm108, 1, 0
    %v111 = vsel %vm109, 1, 0
    %v112 = vadd.s32 %v100, %v110
    %v113 = vadd.s32 %v101, %v111
    %114 = vset.pattern.permute.xlu0 7
    %115 = vperm.xlu0 %114, %v28
    %v116 = vpop.permute.xlu0 %115
    %117 = vset.pattern.permute.xlu0 7
    %118 = vperm.xlu0 %117, %v29
    %v119 = vpop.permute.xlu0 %118
    %vm120 = vcmp.eq.s32.totalorder %v31, %v116
    %vm121 = vcmp.eq.s32.totalorder %v31, %v119
    %v122 = vsel %vm120, 1, 0
    %v123 = vsel %vm121, 1, 0
    %v124 = vadd.s32 %v112, %v122
    %v125 = vadd.s32 %v113, %v123
    %v126 = vcvt.s32.f32 %v124
    %v127 = vcvt.s32.f32 %v125
    %v128 = vld [vmem:[#allocation2] sm:$0xff]
    %v129 = vld [vmem:[#allocation2 + $0x8] sm:$0xff]
    %v130 = vld [vmem:[#allocation2 + $0x10] sm:$0xff]
    %v131 = vld [vmem:[#allocation2 + $0x18] sm:$0xff]
    %v132 = vld [vmem:[#allocation2 + $0x20] sm:$0xff]
    %v133 = vld [vmem:[#allocation2 + $0x28] sm:$0xff]
    %v134 = vld [vmem:[#allocation2 + $0x30] sm:$0xff]
    %v135 = vld [vmem:[#allocation2 + $0x38] sm:$0xff]
    %v136 = vld [vmem:[#allocation2 + $0x40] sm:$0xff]
    %v137 = vld [vmem:[#allocation2 + $0x48] sm:$0xff]
    %v138 = vld [vmem:[#allocation2 + $0x50] sm:$0xff]
    %v139 = vld [vmem:[#allocation2 + $0x58] sm:$0xff]
    %v140 = vld [vmem:[#allocation2 + $0x60] sm:$0xff]
    %v141 = vld [vmem:[#allocation2 + $0x68] sm:$0xff]
    %v142 = vld [vmem:[#allocation2 + $0x70] sm:$0xff]
    %v143 = vld [vmem:[#allocation2 + $0x78] sm:$0xff]
    %v144 = vld [vmem:[#allocation2 + $0x80] sm:$0xff]
    %v145 = vld [vmem:[#allocation2 + $0x88] sm:$0xff]
    %v146 = vld [vmem:[#allocation2 + $0x90] sm:$0xff]
    %v147 = vld [vmem:[#allocation2 + $0x98] sm:$0xff]
    %v148 = vld [vmem:[#allocation2 + $0xa0] sm:$0xff]
    %v149 = vld [vmem:[#allocation2 + $0xa8] sm:$0xff]
    %v150 = vld [vmem:[#allocation2 + $0xb0] sm:$0xff]
    %v151 = vld [vmem:[#allocation2 + $0xb8] sm:$0xff]
    %v152 = vld [vmem:[%s2] sm:$0xf]
    %v153 = vlaneseq
    %v154 = vshrl.u32 %v153, 7
    %v155 = vsub.s32 0, %v154
    %v156 = vrot.slane %v152, %v155
    %vm157 = vcmask 523264
    %v159 = vsel %vm157, %v126, 0
    %v162 = vsel %vm157, %v127, 0
    %164 = vmatprep.subr.mxu0 0.0
    %165 = vmatpush1.msra.mxu0 %v128
    %166 = vmatprep.subr.mxu0 0.0
    %167 = vmatpush1.msra.mxu0 %v129
    %168 = vmatprep.subr.mxu0 0.0
    %169 = vmatpush1.msra.mxu0 %v130
    %170 = vmatprep.subr.mxu0 0.0
    %171 = vmatpush1.msra.mxu0 %v131
    %172 = vmatprep.subr.mxu0 0.0
    %173 = vmatpush1.msra.mxu0 %v132
    %174 = vmatprep.subr.mxu0 0.0
    %175 = vmatpush1.msra.mxu0 %v133
    %176 = vmatprep.subr.mxu0 0.0
    %177 = vmatpush1.msra.mxu0 %v134
    %178 = vmatprep.subr.mxu0 0.0
    %179 = vmatpush1.msra.mxu0 %v135
    %180 = vmatprep.subr.mxu0 0.0
    %181 = vmatpush1.msra.mxu0 0.0
    %182 = vmatprep.subr.mxu0 0.0
    %183 = vmatpush1.msra.mxu0 0.0
    %184 = vmatprep.subr.mxu0 0.0
    %185 = vmatpush1.msra.mxu0 0.0
    %186 = vmatprep.subr.mxu0 0.0
    %187 = vmatpush1.msra.mxu0 0.0
    %188 = vmatprep.subr.mxu0 0.0
    %189 = vmatpush1.msra.mxu0 0.0
    %190 = vmatprep.subr.mxu0 0.0
    %191 = vmatpush1.msra.mxu0 0.0
    %192 = vmatprep.subr.mxu0 0.0
    %193 = vmatpush1.msra.mxu0 0.0
    %194 = vmatprep.subr.mxu0 0.0
    %195 = vmatpush1.msra.mxu0 0.0
    %196 = vmatprep.subr.mxu0 0.0
    %197 = vmatpush1.msra.mxu0 0.0
    %198 = vmatprep.subr.mxu0 0.0
    %199 = vmatpush1.msra.mxu0 0.0
    %200 = vmatprep.subr.mxu0 0.0
    %201 = vmatpush1.msra.mxu0 0.0
    %202 = vmatprep.subr.mxu0 0.0
    %203 = vmatpush1.msra.mxu0 0.0
    %204 = vmatprep.subr.mxu0 0.0
    %205 = vmatpush1.msra.mxu0 0.0
    %206 = vmatprep.subr.mxu0 0.0
    %207 = vmatpush1.msra.mxu0 0.0
    %208 = vmatprep.subr.mxu0 0.0
    %209 = vmatpush1.msra.mxu0 0.0
    %210 = vmatprep.subr.mxu0 0.0
    %211 = vmatpush1.msra.mxu0 0.0
    %212 = vmatprep.subr.mxu0 0.0
    %213 = vmatpush1.msra.mxu0 0.0
    %214 = vmatprep.subr.mxu0 0.0
    %215 = vmatpush1.msra.mxu0 0.0
    %216 = vmatprep.subr.mxu0 0.0
    %217 = vmatpush1.msra.mxu0 0.0
    %218 = vmatprep.subr.mxu0 0.0
    %219 = vmatpush1.msra.mxu0 0.0
    %220 = vmatprep.subr.mxu0 0.0
    %221 = vmatpush1.msra.mxu0 0.0
    %222 = vmatprep.subr.mxu0 0.0
    %223 = vmatpush1.msra.mxu0 0.0
    %224 = vmatprep.subr.mxu0 0.0
    %225 = vmatpush1.msra.mxu0 0.0
    %226 = vmatprep.subr.mxu0 0.0
    %227 = vmatpush1.msra.mxu0 0.0
    %228 = vmatprep.mubr.f32.mxu0 0.0
    %229 = vmatmul.mubr.f32.gmra.mrb[0].mxu0 %v159
    %v230 = vpop.f32.mrb[0].mxu0
    %v231 = vadd.f32 %v156, %v230
    %v232 = vpop.f32.mrb[0].mxu0
    %233 = vmatprep.mubr.f32.mxu0 0.0
    %234 = vmatmul.mubr.f32.gmra.mrb[0].mxu0 %v162
    %v235 = vpop.f32.mrb[0].mxu0
    %v236 = vadd.f32 %v156, %v235
    %v237 = vpop.f32.mrb[0].mxu0
    %238 = vdwg.mxu0
    %v239 = vtanh.pop %v231
    %v240 = vtanh.pop %v236
    %v241 = vlaneseq
    %v242 = vshrl.u32 %v241, 7
    %v243 = vsub.s32 1, %v242
    %v244 = vrot.slane %v152, %v243
    %vm245 = vcmask 261120
    %v247 = vsel %vm245, %v239, 0
    %v250 = vsel %vm245, %v240, 0
    %252 = vmatprep.subr.mxu0 0.0
    %253 = vmatpush1.msra.mxu0 %v136
    %254 = vmatprep.subr.mxu0 0.0
    %255 = vmatpush1.msra.mxu0 %v137
    %256 = vmatprep.subr.mxu0 0.0
    %257 = vmatpush1.msra.mxu0 %v138
    %258 = vmatprep.subr.mxu0 0.0
    %259 = vmatpush1.msra.mxu0 %v139
    %260 = vmatprep.subr.mxu0 0.0
    %261 = vmatpush1.msra.mxu0 0.0
    %262 = vmatprep.subr.mxu0 0.0
    %263 = vmatpush1.msra.mxu0 0.0
    %264 = vmatprep.subr.mxu0 0.0
    %265 = vmatpush1.msra.mxu0 0.0
    %266 = vmatprep.subr.mxu0 0.0
    %267 = vmatpush1.msra.mxu0 0.0
    %268 = vmatprep.subr.mxu0 0.0
    %269 = vmatpush1.msra.mxu0 0.0
    %270 = vmatprep.subr.mxu0 0.0
    %271 = vmatpush1.msra.mxu0 0.0
    %272 = vmatprep.subr.mxu0 0.0
    %273 = vmatpush1.msra.mxu0 0.0
    %274 = vmatprep.subr.mxu0 0.0
    %275 = vmatpush1.msra.mxu0 0.0
    %276 = vmatprep.subr.mxu0 0.0
    %277 = vmatpush1.msra.mxu0 0.0
    %278 = vmatprep.subr.mxu0 0.0
    %279 = vmatpush1.msra.mxu0 0.0
    %280 = vmatprep.subr.mxu0 0.0
    %281 = vmatpush1.msra.mxu0 0.0
    %282 = vmatprep.subr.mxu0 0.0
    %283 = vmatpush1.msra.mxu0 0.0
    %284 = vmatprep.subr.mxu0 0.0
    %285 = vmatpush1.msra.mxu0 0.0
    %286 = vmatprep.subr.mxu0 0.0
    %287 = vmatpush1.msra.mxu0 0.0
    %288 = vmatprep.subr.mxu0 0.0
    %289 = vmatpush1.msra.mxu0 0.0
    %290 = vmatprep.subr.mxu0 0.0
    %291 = vmatpush1.msra.mxu0 0.0
    %292 = vmatprep.subr.mxu0 0.0
    %293 = vmatpush1.msra.mxu0 0.0
    %294 = vmatprep.subr.mxu0 0.0
    %295 = vmatpush1.msra.mxu0 0.0
    %296 = vmatprep.subr.mxu0 0.0
    %297 = vmatpush1.msra.mxu0 0.0
    %298 = vmatprep.subr.mxu0 0.0
    %299 = vmatpush1.msra.mxu0 0.0
    %300 = vmatprep.subr.mxu0 0.0
    %301 = vmatpush1.msra.mxu0 0.0
    %302 = vmatprep.subr.mxu0 0.0
    %303 = vmatpush1.msra.mxu0 0.0
    %304 = vmatprep.subr.mxu0 0.0
    %305 = vmatpush1.msra.mxu0 0.0
    %306 = vmatprep.subr.mxu0 0.0
    %307 = vmatpush1.msra.mxu0 0.0
    %308 = vmatprep.subr.mxu0 0.0
    %309 = vmatpush1.msra.mxu0 0.0
    %310 = vmatprep.subr.mxu0 0.0
    %311 = vmatpush1.msra.mxu0 0.0
    %312 = vmatprep.subr.mxu0 0.0
    %313 = vmatpush1.msra.mxu0 0.0
    %314 = vmatprep.subr.mxu0 0.0
    %315 = vmatpush1.msra.mxu0 0.0
    %316 = vmatprep.mubr.f32.mxu0 0.0
    %317 = vmatmul.mubr.f32.gmra.mrb[0].mxu0 %v247
    %v318 = vpop.f32.mrb[0].mxu0
    %v319 = vadd.f32 %v244, %v318
    %v320 = vpop.f32.mrb[0].mxu0
    %321 = vmatprep.mubr.f32.mxu0 0.0
    %322 = vmatmul.mubr.f32.gmra.mrb[0].mxu0 %v250
    %v323 = vpop.f32.mrb[0].mxu0
    %v324 = vadd.f32 %v244, %v323
    %v325 = vpop.f32.mrb[0].mxu0
    %326 = vdwg.mxu0
    %v327 = vtanh.pop %v319
    %v328 = vtanh.pop %v324
    %330 = vrot.lane.b32.xlu0 %v328, 32
    %v331 = vpop.permute.xlu0 %330
    %v333 = vsel %vm245, %v327, %v331
    %v334 = vlaneseq
    %v335 = vshrl.u32 %v334, 7
    %v336 = vsub.s32 2, %v335
    %v337 = vrot.slane %v152, %v336
    %v339 = vsel %vm157, %v333, 0
    %341 = vmatprep.subr.mxu0 0.0
    %342 = vmatpush1.msra.mxu0 %v140
    %343 = vmatprep.subr.mxu0 0.0
    %344 = vmatpush1.msra.mxu0 %v141
    %345 = vmatprep.subr.mxu0 0.0
    %346 = vmatpush1.msra.mxu0 %v142
    %347 = vmatprep.subr.mxu0 0.0
    %348 = vmatpush1.msra.mxu0 %v143
    %349 = vmatprep.subr.mxu0 0.0
    %350 = vmatpush1.msra.mxu0 %v144
    %351 = vmatprep.subr.mxu0 0.0
    %352 = vmatpush1.msra.mxu0 %v145
    %353 = vmatprep.subr.mxu0 0.0
    %354 = vmatpush1.msra.mxu0 %v146
    %355 = vmatprep.subr.mxu0 0.0
    %356 = vmatpush1.msra.mxu0 %v147
    %357 = vmatprep.subr.mxu0 0.0
    %358 = vmatpush1.msra.mxu0 0.0
    %359 = vmatprep.subr.mxu0 0.0
    %360 = vmatpush1.msra.mxu0 0.0
    %361 = vmatprep.subr.mxu0 0.0
    %362 = vmatpush1.msra.mxu0 0.0
    %363 = vmatprep.subr.mxu0 0.0
    %364 = vmatpush1.msra.mxu0 0.0
    %365 = vmatprep.subr.mxu0 0.0
    %366 = vmatpush1.msra.mxu0 0.0
    %367 = vmatprep.subr.mxu0 0.0
    %368 = vmatpush1.msra.mxu0 0.0
    %369 = vmatprep.subr.mxu0 0.0
    %370 = vmatpush1.msra.mxu0 0.0
    %371 = vmatprep.subr.mxu0 0.0
    %372 = vmatpush1.msra.mxu0 0.0
    %373 = vmatprep.subr.mxu0 0.0
    %374 = vmatpush1.msra.mxu0 0.0
    %375 = vmatprep.subr.mxu0 0.0
    %376 = vmatpush1.msra.mxu0 0.0
    %377 = vmatprep.subr.mxu0 0.0
    %378 = vmatpush1.msra.mxu0 0.0
    %379 = vmatprep.subr.mxu0 0.0
    %380 = vmatpush1.msra.mxu0 0.0
    %381 = vmatprep.subr.mxu0 0.0
    %382 = vmatpush1.msra.mxu0 0.0
    %383 = vmatprep.subr.mxu0 0.0
    %384 = vmatpush1.msra.mxu0 0.0
    %385 = vmatprep.subr.mxu0 0.0
    %386 = vmatpush1.msra.mxu0 0.0
    %387 = vmatprep.subr.mxu0 0.0
    %388 = vmatpush1.msra.mxu0 0.0
    %389 = vmatprep.subr.mxu0 0.0
    %390 = vmatpush1.msra.mxu0 0.0
    %391 = vmatprep.subr.mxu0 0.0
    %392 = vmatpush1.msra.mxu0 0.0
    %393 = vmatprep.subr.mxu0 0.0
    %394 = vmatpush1.msra.mxu0 0.0
    %395 = vmatprep.subr.mxu0 0.0
    %396 = vmatpush1.msra.mxu0 0.0
    %397 = vmatprep.subr.mxu0 0.0
    %398 = vmatpush1.msra.mxu0 0.0
    %399 = vmatprep.subr.mxu0 0.0
    %400 = vmatpush1.msra.mxu0 0.0
    %401 = vmatprep.subr.mxu0 0.0
    %402 = vmatpush1.msra.mxu0 0.0
    %403 = vmatprep.subr.mxu0 0.0
    %404 = vmatpush1.msra.mxu0 0.0
    %405 = vmatprep.mubr.f32.mxu0 0.0
    %406 = vmatmul.mubr.f32.gmra.mrb[0].mxu0 %v339
    %v407 = vpop.f32.mrb[0].mxu0
    %v408 = vadd.f32 %v337, %v407
    %v409 = vpop.f32.mrb[0].mxu0
    %410 = vdwg.mxu0
    %v411 = vtanh.pop %v408
    %v412 = vlaneseq
    %v413 = vshrl.u32 %v412, 7
    %v414 = vsub.s32 3, %v413
    %v415 = vrot.slane %v152, %v414
    %v417 = vsel %vm245, %v411, 0
    %419 = vmatprep.subr.mxu0 0.0
    %420 = vmatpush1.msra.mxu0 %v148
    %421 = vmatprep.subr.mxu0 0.0
    %422 = vmatpush1.msra.mxu0 %v149
    %423 = vmatprep.subr.mxu0 0.0
    %424 = vmatpush1.msra.mxu0 %v150
    %425 = vmatprep.subr.mxu0 0.0
    %426 = vmatpush1.msra.mxu0 %v151
    %427 = vmatprep.subr.mxu0 0.0
    %428 = vmatpush1.msra.mxu0 0.0
    %429 = vmatprep.subr.mxu0 0.0
    %430 = vmatpush1.msra.mxu0 0.0
    %431 = vmatprep.subr.mxu0 0.0
    %432 = vmatpush1.msra.mxu0 0.0
    %433 = vmatprep.subr.mxu0 0.0
    %434 = vmatpush1.msra.mxu0 0.0
    %435 = vmatprep.subr.mxu0 0.0
    %436 = vmatpush1.msra.mxu0 0.0
    %437 = vmatprep.subr.mxu0 0.0
    %438 = vmatpush1.msra.mxu0 0.0
    %439 = vmatprep.subr.mxu0 0.0
    %440 = vmatpush1.msra.mxu0 0.0
    %441 = vmatprep.subr.mxu0 0.0
    %442 = vmatpush1.msra.mxu0 0.0
    %443 = vmatprep.subr.mxu0 0.0
    %444 = vmatpush1.msra.mxu0 0.0
    %445 = vmatprep.subr.mxu0 0.0
    %446 = vmatpush1.msra.mxu0 0.0
    %447 = vmatprep.subr.mxu0 0.0
    %448 = vmatpush1.msra.mxu0 0.0
    %449 = vmatprep.subr.mxu0 0.0
    %450 = vmatpush1.msra.mxu0 0.0
    %451 = vmatprep.subr.mxu0 0.0
    %452 = vmatpush1.msra.mxu0 0.0
    %453 = vmatprep.subr.mxu0 0.0
    %454 = vmatpush1.msra.mxu0 0.0
    %455 = vmatprep.subr.mxu0 0.0
    %456 = vmatpush1.msra.mxu0 0.0
    %457 = vmatprep.subr.mxu0 0.0
    %458 = vmatpush1.msra.mxu0 0.0
    %459 = vmatprep.subr.mxu0 0.0
    %460 = vmatpush1.msra.mxu0 0.0
    %461 = vmatprep.subr.mxu0 0.0
    %462 = vmatpush1.msra.mxu0 0.0
    %463 = vmatprep.subr.mxu0 0.0
    %464 = vmatpush1.msra.mxu0 0.0
    %465 = vmatprep.subr.mxu0 0.0
    %466 = vmatpush1.msra.mxu0 0.0
    %467 = vmatprep.subr.mxu0 0.0
    %468 = vmatpush1.msra.mxu0 0.0
    %469 = vmatprep.subr.mxu0 0.0
    %470 = vmatpush1.msra.mxu0 0.0
    %471 = vmatprep.subr.mxu0 0.0
    %472 = vmatpush1.msra.mxu0 0.0
    %473 = vmatprep.subr.mxu0 0.0
    %474 = vmatpush1.msra.mxu0 0.0
    %475 = vmatprep.subr.mxu0 0.0
    %476 = vmatpush1.msra.mxu0 0.0
    %477 = vmatprep.subr.mxu0 0.0
    %478 = vmatpush1.msra.mxu0 0.0
    %479 = vmatprep.subr.mxu0 0.0
    %480 = vmatpush1.msra.mxu0 0.0
    %481 = vmatprep.subr.mxu0 0.0
    %482 = vmatpush1.msra.mxu0 0.0
    %483 = vmatprep.mubr.f32.mxu0 0.0
    %484 = vmatmul.mubr.f32.gmra.mrb[0].mxu0 %v417
    %v485 = vpop.f32.mrb[0].mxu0
    %v486 = vadd.f32 %v415, %v485
    %v487 = vpop.f32.mrb[0].mxu0
    %488 = vdwg.mxu0
    %489 = vst [vmem:[%s3] sm:$0xff] %v486
    // Predicated region
    $region18: #{forward.1} parent=1 // pred_check
      _
    $region19: #{forward.1} parent=1 // pred_check_branch
      %491 = sbr.rel (0) target = $region21
    $region20: #{forward.1} parent=1 // pred_region
      _
    $region21: #{forward.1} parent=1 // pred_fallthru
      _
    // Predicated region
    $region22: #{forward.1} parent=1 // pred_check
      _
    $region23: #{forward.1} parent=1 // pred_check_branch
      %493 = sbr.rel (0) target = $region25
    $region24: #{forward.1} parent=1 // pred_region
      _
    $region25: #{forward.1} parent=1 // pred_fallthru
      _
    %494 = vsyncpa [#allocation3], 1

</llo_original>
